<compile_context>
chip_gen: v5e
topology: v5e:2x2
jax: 0.10.0
libtpu: 0.0.40
codegen_flags: <defaults>
</compile_context>

<pallas_src>
import functools

import jax
import jax.numpy as jnp
from jax import lax
from jax.experimental import pallas as pl
from jax.experimental.pallas import tpu as pltpu

_VMEM = pl.BlockSpec(memory_space=pltpu.MemorySpace.VMEM)


# ----------------------------------------------------------------------------
# helpers
# ----------------------------------------------------------------------------
def _round_up(x, m):
    return (x + m - 1) // m * m


_VMEM_LIMIT_CACHE = None


def _vmem_limit():
    """Generation-aware scoped-VMEM limit (v7x: 64 MiB/TC, v5e/v6e: 128)."""
    global _VMEM_LIMIT_CACHE
    if _VMEM_LIMIT_CACHE is None:
        cap = 128 * 1024 * 1024
        try:
            cap = int(getattr(pltpu.get_tpu_info(), "vmem_capacity_bytes", cap))
        except Exception:
            pass
        _VMEM_LIMIT_CACHE = int(min(48 * 1024 * 1024, cap // 2))
    return _VMEM_LIMIT_CACHE


def _lane_chunk(mp, c, budget=64 * 1024):
    """Largest 128-multiple lane chunk keeping an (mp, chunk) f32 value small."""
    chunk = max(128, min(c, (budget // (mp * 4)) // 128 * 128))
    while c % chunk:
        chunk -= 128
    return chunk


def _tap_masks_s1(B, H, W, Mp):
    """(9, Mp, 1) validity masks for the stride-1 3x3 shifted-matmul taps."""
    r = jnp.arange(B * H * W, dtype=jnp.int32)
    h = (r // W) % H
    w = r % W
    rows = []
    for di in (-1, 0, 1):
        for dj in (-1, 0, 1):
            rows.append((h + di >= 0) & (h + di < H) &
                        (w + dj >= 0) & (w + dj < W))
    m = jnp.stack(rows, axis=0).astype(jnp.float32)
    return jnp.pad(m, ((0, 0), (0, Mp - B * H * W)))[:, :, None]


def _tap_masks_s2(B, Ho, Wo, Mp):
    """(9, Mp, 1) validity masks for the stride-2 (phase-decomposed) taps."""
    r = jnp.arange(B * Ho * Wo, dtype=jnp.int32)
    h = (r // Wo) % Ho
    w = r % Wo
    rows = []
    for di in (-1, 0, 1):
        for dj in (-1, 0, 1):
            rows.append((h >= (1 if di < 0 else 0)) &
                        (w >= (1 if dj < 0 else 0)))
    m = jnp.stack(rows, axis=0).astype(jnp.float32)
    return jnp.pad(m, ((0, 0), (0, Mp - B * Ho * Wo)))[:, :, None]


# ----------------------------------------------------------------------------
# Pallas kernels
# ----------------------------------------------------------------------------
def _mm_bias_kernel(a_ref, b_ref, bias_ref, o_ref, *, relu):
    """Single-pass matmul (K untiled, fits VMEM) + fused bias(+ReLU) store."""
    out = jnp.dot(a_ref[...], b_ref[...], preferred_element_type=jnp.float32)
    out = out + bias_ref[...]
    if relu:
        out = jnp.maximum(out, 0.0)
    o_ref[...] = out.astype(o_ref.dtype)


def _chain_kernel(x_ref, w1_ref, b1_ref, w2_ref, b2_ref, w3_ref, b3_ref,
                  mask_ref, o_ref, act_ref, mid_ref, *,
                  taps, halo, m_valid, n_chunk):
    """One grid step == one identity bottleneck; activation stays in VMEM."""
    b = pl.program_id(0)
    mp, c4 = act_ref.shape
    width = mid_ref.shape[1]

    @pl.when(b == 0)
    def _init():
        x = x_ref[...].astype(jnp.float32)
        if m_valid != mp:
            rows = lax.broadcasted_iota(jnp.int32, (mp, 1), 0)
            x = jnp.where(rows < m_valid, x, 0.0)
        act_ref[...] = x
        mid_ref[...] = jnp.zeros_like(mid_ref)          # zero halos once

    # conv1 (1x1) + folded BN + ReLU -> zero-haloed intermediate
    a0 = act_ref[...].astype(jnp.bfloat16)
    m1 = jnp.dot(a0, w1_ref[0], preferred_element_type=jnp.float32) + b1_ref[0]
    mid_ref[halo:halo + mp, :] = jnp.maximum(m1, 0.0)

    # conv2 (3x3, stride 1) as 9 shifted, boundary-masked matmuls
    acc = jnp.zeros((mp, width), jnp.float32)
    for t, shift in enumerate(taps):
        a = mid_ref[halo + shift:halo + shift + mp, :] * mask_ref[t]
        acc = acc + jnp.dot(a.astype(jnp.bfloat16), w2_ref[0, t],
                            preferred_element_type=jnp.float32)
    m2 = jnp.maximum(acc + b2_ref[0], 0.0).astype(jnp.bfloat16)

    # conv3 (1x1) + residual + ReLU, chunked over output lanes
    if m_valid != mp:
        rows = lax.broadcasted_iota(jnp.int32, (mp, 1), 0)
        rmask = (rows < m_valid).astype(jnp.float32)
    for j0 in range(0, c4, n_chunk):
        seg = jnp.dot(m2, w3_ref[0, :, j0:j0 + n_chunk],
                      preferred_element_type=jnp.float32)
        seg = seg + b3_ref[0, :, j0:j0 + n_chunk] + act_ref[:, j0:j0 + n_chunk]
        seg = jnp.maximum(seg, 0.0)
        if m_valid != mp:
            seg = seg * rmask                 # keep padded rows exactly zero
        act_ref[:, j0:j0 + n_chunk] = seg

    @pl.when(b == pl.num_programs(0) - 1)
    def _done():
        o_ref[...] = act_ref[...].astype(o_ref.dtype)


def _down_block_kernel(xp_ref, w1_ref, b1_ref, w2_ref, b2_ref, w3_ref, b3_ref,
                       wd_ref, bd_ref, mask_ref, o_ref, mid_ref, *,
                       taps, halo, m_valid, n_chunk):
    """Whole downsample bottleneck (1x1 -> 3x3[/s2] -> 1x1 + 1x1-ds + ReLU)."""
    n_phase, mp, _ = xp_ref.shape
    width = mid_ref.shape[-1]
    c4 = o_ref.shape[-1]

    mid_ref[...] = jnp.zeros_like(mid_ref)

    # conv1 (1x1, stride 1) applied per stride-phase of the input
    for p in range(n_phase):
        m1 = jnp.dot(xp_ref[p], w1_ref[...],
                     preferred_element_type=jnp.float32) + b1_ref[...]
        mid_ref[p, halo:halo + mp, :] = jnp.maximum(m1, 0.0)

    # conv2 (3x3, stride 1 or 2) as 9 shifted, masked matmuls on phases
    acc = jnp.zeros((mp, width), jnp.float32)
    for t, (p, shift) in enumerate(taps):
        a = mid_ref[p, halo + shift:halo + shift + mp, :] * mask_ref[t]
        acc = acc + jnp.dot(a.astype(jnp.bfloat16), w2_ref[t],
                            preferred_element_type=jnp.float32)
    m2 = jnp.maximum(acc + b2_ref[...], 0.0).astype(jnp.bfloat16)

    # conv3 + strided 1x1 downsample residual + ReLU, chunked over lanes
    x0 = xp_ref[0]                       # phase (0,0) == stride-picked rows
    if m_valid != mp:
        rows = lax.broadcasted_iota(jnp.int32, (mp, 1), 0)
        rmask = (rows < m_valid).astype(jnp.float32)
    for j0 in range(0, c4, n_chunk):
        seg = jnp.dot(m2, w3_ref[:, j0:j0 + n_chunk],
                      preferred_element_type=jnp.float32)
        seg = seg + jnp.dot(x0, wd_ref[:, j0:j0 + n_chunk],
                            preferred_element_type=jnp.float32)
        seg = seg + b3_ref[:, j0:j0 + n_chunk] + bd_ref[:, j0:j0 + n_chunk]
        seg = jnp.maximum(seg, 0.0)
        if m_valid != mp:
            seg = seg * rmask
        o_ref[:, j0:j0 + n_chunk] = seg.astype(o_ref.dtype)


def _maxpool_kernel(p00_ref, p01_ref, p10_ref, p11_ref, o_ref, *, ho, wo):
    """MaxPool(3,2,1): pure-VPU running max over 9 shifted phase views."""
    def s(ref, dh, dw):
        return ref[:, dh:dh + ho, dw:dw + wo, :].astype(jnp.float32)

    m = s(p00_ref, 0, 0)
    m = jnp.maximum(m, s(p01_ref, 0, 0))
    m = jnp.maximum(m, s(p00_ref, 0, 1))
    m = jnp.maximum(m, s(p10_ref, 0, 0))
    m = jnp.maximum(m, s(p11_ref, 0, 0))
    m = jnp.maximum(m, s(p10_ref, 0, 1))
    m = jnp.maximum(m, s(p00_ref, 1, 0))
    m = jnp.maximum(m, s(p01_ref, 1, 0))
    m = jnp.maximum(m, s(p00_ref, 1, 1))
    o_ref[...] = m.astype(o_ref.dtype)


def _head_kernel(x_ref, w_ref, b_ref, o_ref):
    """Fused AdaptiveAvgPool2d((1,1)) + Flatten + Linear (bf16 MXU, f32 acc)."""
    pooled = jnp.mean(x_ref[...].astype(jnp.float32), axis=1)        # (B, C)
    out = jnp.dot(pooled.astype(jnp.bfloat16), w_ref[...],
                  preferred_element_type=jnp.float32)
    o_ref[...] = out + b_ref[...]


# ----------------------------------------------------------------------------
# Pallas wrappers
# ----------------------------------------------------------------------------
def matmul_bias(a, b, bias, relu=True, out_dtype=jnp.bfloat16):
    """out = A @ B + bias (+ReLU).  No K grid axis (K always fits VMEM)."""
    m, k = a.shape
    n = b.shape[1]                       # callers pass lane-dense N (x128)
    mp = _round_up(m, 8)
    if mp != m:
        a = jnp.pad(a, ((0, mp - m), (0, 0)))
    tm = min(mp, 256)
    while mp % tm:
        tm -= 8
    tn = min(n, 256)
    while n % tn:
        tn -= 128
    bias2 = bias.reshape(1, n).astype(jnp.float32)
    out = pl.pallas_call(
        functools.partial(_mm_bias_kernel, relu=relu),
        out_shape=jax.ShapeDtypeStruct((mp, n), out_dtype),
        grid=(mp // tm, n // tn),
        in_specs=[pl.BlockSpec((tm, k), lambda i, j: (i, 0)),
                  pl.BlockSpec((k, tn), lambda i, j: (0, j)),
                  pl.BlockSpec((1, tn), lambda i, j: (0, j))],
        out_specs=pl.BlockSpec((tm, tn), lambda i, j: (i, j)),
        compiler_params=pltpu.CompilerParams(
            dimension_semantics=("parallel", "parallel"),
            vmem_limit_bytes=_vmem_limit()),
        cost_estimate=pl.CostEstimate(
            flops=2 * mp * n * k, transcendentals=0,
            bytes_accessed=mp * k * 2 + k * n * 2 + mp * n * 2),
    )(a.astype(jnp.bfloat16), b.astype(jnp.bfloat16), bias2)
    return out[:m]


def stem_conv(x, w, bias):
    """7x7 / stride-2 / pad-3 conv + folded BN + ReLU (im2col + tiled matmul)."""
    B, H, W_sp, cin = x.shape
    kh = kw = 7
    stride, pad = 2, 3
    cout = w.shape[-1]
    ho = (H + 2 * pad - kh) // stride + 1
    wo = (W_sp + 2 * pad - kw) // stride + 1
    xp = jnp.pad(x, ((0, 0), (pad, pad), (pad, pad), (0, 0)))
    cols = []
    for i in range(kh):
        for j in range(kw):
            cols.append(xp[:, i:i + stride * ho:stride,
                           j:j + stride * wo:stride, :])
    a = jnp.concatenate(cols, axis=-1).reshape(B * ho * wo, kh * kw * cin)
    k = kh * kw * cin
    kp = _round_up(k, 16)                        # bf16 sublane packing of W
    n_pad = _round_up(cout, 128)                 # lane-dense output store
    a = jnp.pad(a, ((0, 0), (0, kp - k)))
    wm = jnp.pad(w.reshape(k, cout), ((0, kp - k), (0, n_pad - cout)))
    bias_p = jnp.pad(bias, (0, n_pad - cout))
    out = matmul_bias(a, wm, bias_p, relu=True)
    return out[:, :cout].reshape(B, ho, wo, cout)


def maxpool_3x3_s2(x):
    """nn.MaxPool2d(3, stride=2, padding=1), whole batch in a single launch."""
    B, H, W, C = x.shape
    ho = (H + 2 - 3) // 2 + 1
    wo = (W + 2 - 3) // 2 + 1
    xp = jnp.pad(x, ((0, 0), (1, 1), (1, 1), (0, 0)),
                 constant_values=-jnp.inf)
    phases = [xp[:, a::2, c::2, :] for a in (0, 1) for c in (0, 1)]
    return pl.pallas_call(
        functools.partial(_maxpool_kernel, ho=ho, wo=wo),
        out_shape=jax.ShapeDtypeStruct((B, ho, wo, C), x.dtype),
        in_specs=[_VMEM] * 4,
        out_specs=_VMEM,
    )(*phases)


def fused_downsample_block(x, p, stride):
    """One pallas_call for a bottleneck with a (possibly strided) downsample."""
    B, H, W, cin = x.shape
    width = p["w1"].shape[1]
    c4 = p["w3"].shape[1]
    if stride == 1:
        Ho, Wo = H, W
        phases = x.reshape(1, B * H * W, cin)
        taps = tuple((0, di * W + dj)
                     for di in (-1, 0, 1) for dj in (-1, 0, 1))
        masks_fn = lambda Mp: _tap_masks_s1(B, H, W, Mp)
    else:
        Ho, Wo = H // 2, W // 2
        ph = [x[:, a::2, c::2, :].reshape(B * Ho * Wo, cin)
              for a in (0, 1) for c in (0, 1)]
        phases = jnp.stack(ph, axis=0)
        taps = tuple((2 * (1 if di else 0) + (1 if dj else 0),
                      (-1 if di < 0 else 0) * Wo + (-1 if dj < 0 else 0))
                     for di in (-1, 0, 1) for dj in (-1, 0, 1))
        masks_fn = lambda Mp: _tap_masks_s2(B, Ho, Wo, Mp)

    n_phase = phases.shape[0]
    Mo = B * Ho * Wo
    Mp = _round_up(Mo, 8)
    if Mp != Mo:
        phases = jnp.pad(phases, ((0, 0), (0, Mp - Mo), (0, 0)))
    phases = phases.astype(jnp.bfloat16)
    halo = _round_up(Wo + 1, 8)                  # sublane-aligned halo
    masks = masks_fn(Mp)
    nck = _lane_chunk(Mp, c4)

    kern = functools.partial(_down_block_kernel, taps=taps, halo=halo,
                             m_valid=Mo, n_chunk=nck)
    full = lambda arr: pl.BlockSpec(arr.shape, lambda i: (0,) * arr.ndim)
    args = (phases, p["w1"], p["b1"], p["w2"], p["b2"], p["w3"], p["b3"],
            p["wd"], p["bd"], masks)
    out = pl.pallas_call(
        kern,
        out_shape=jax.ShapeDtypeStruct((Mp, c4), jnp.bfloat16),
        grid=(1,),
        in_specs=[full(arr) for arr in args],
        out_specs=pl.BlockSpec((Mp, c4), lambda i: (0, 0)),
        scratch_shapes=[pltpu.VMEM((n_phase, 2 * halo + Mp, width),
                                   jnp.float32)],
        compiler_params=pltpu.CompilerParams(
            dimension_semantics=("arbitrary",),
            vmem_limit_bytes=_vmem_limit()),
    )(*args)
    return out[:Mo].reshape(B, Ho, Wo, c4)


def bottleneck_chain(x, p):
    """All identity bottlenecks of one stage in one pallas_call (grid=blocks)."""
    B, H, W, c4 = x.shape
    n_blocks, _, width = p["w1"].shape
    M = B * H * W
    Mp = _round_up(M, 8)
    xf = x.reshape(M, c4)
    if Mp != M:
        xf = jnp.pad(xf, ((0, Mp - M), (0, 0)))
    xf = xf.astype(jnp.bfloat16)
    halo = _round_up(W + 1, 8)
    masks = _tap_masks_s1(B, H, W, Mp)
    taps = tuple(di * W + dj for di in (-1, 0, 1) for dj in (-1, 0, 1))
    nck = _lane_chunk(Mp, c4)

    kern = functools.partial(_chain_kernel, taps=taps, halo=halo,
                             m_valid=M, n_chunk=nck)
    flops_blk = 2 * Mp * (c4 * width + 9 * width * width + width * c4)
    out = pl.pallas_call(
        kern,
        out_shape=jax.ShapeDtypeStruct((Mp, c4), jnp.bfloat16),
        grid=(n_blocks,),
        in_specs=[
            pl.BlockSpec((Mp, c4), lambda b: (0, 0)),
            pl.BlockSpec((1, c4, width), lambda b: (b, 0, 0)),
            pl.BlockSpec((1, 1, width), lambda b: (b, 0, 0)),
            pl.BlockSpec((1, 9, width, width), lambda b: (b, 0, 0, 0)),
            pl.BlockSpec((1, 1, width), lambda b: (b, 0, 0)),
            pl.BlockSpec((1, width, c4), lambda b: (b, 0, 0)),
            pl.BlockSpec((1, 1, c4), lambda b: (b, 0, 0)),
            pl.BlockSpec((9, Mp, 1), lambda b: (0, 0, 0)),
        ],
        out_specs=pl.BlockSpec((Mp, c4), lambda b: (0, 0)),
        scratch_shapes=[pltpu.VMEM((Mp, c4), jnp.float32),
                        pltpu.VMEM((2 * halo + Mp, width), jnp.float32)],
        compiler_params=pltpu.CompilerParams(
            dimension_semantics=("arbitrary",),
            vmem_limit_bytes=_vmem_limit()),
        cost_estimate=pl.CostEstimate(
            flops=n_blocks * flops_blk, transcendentals=0,
            bytes_accessed=(n_blocks * (2 * c4 * width * 2
                                        + 9 * width * width * 2)
                            + 2 * Mp * c4 * 2)),
    )(xf, p["w1"], p["b1"], p["w2"], p["b2"], p["w3"], p["b3"], masks)
    return out[:M].reshape(B, H, W, c4)


def avgpool_flatten_linear(x, w_fc, b_fc, num_classes):
    """AdaptiveAvgPool2d((1,1)) + Flatten + Linear, fused, lane-dense output."""
    B, H, W, C = x.shape
    out = pl.pallas_call(
        _head_kernel,
        out_shape=jax.ShapeDtypeStruct((B, w_fc.shape[1]), jnp.float32),
        in_specs=[_VMEM, _VMEM, _VMEM],
        out_specs=_VMEM,
    )(x.reshape(B, H * W, C), w_fc, b_fc)
    return out[:, :num_classes]


# ----------------------------------------------------------------------------
# Deterministic synthetic parameters (ResNet-152 topology, BN folded, bf16)
# ----------------------------------------------------------------------------
class _ParamGen:
    def __init__(self, key):
        self.key = key

    def next(self):
        self.key, sub = jax.random.split(self.key)
        return sub


def make_conv_bn(pg, kh, kw, cin, cout, scale=1.0):
    """Conv weight (He init) with eval-mode BatchNorm folded in (bf16)."""
    fan_in = kh * kw * cin
    w = jax.random.normal(pg.next(), (kh, kw, cin, cout), jnp.float32)
    w = w * jnp.sqrt(2.0 / fan_in) * scale
    gamma = 1.0 + 0.1 * jax.random.normal(pg.next(), (cout,), jnp.float32)
    beta = 0.1 * jax.random.normal(pg.next(), (cout,), jnp.float32)
    run_mean = 0.1 * jax.random.normal(pg.next(), (cout,), jnp.float32)
    run_var = jax.random.uniform(pg.next(), (cout,), jnp.float32, 0.5, 1.5)
    s = gamma / jnp.sqrt(run_var + 1e-5)
    return (w * s).astype(jnp.bfloat16), (beta - run_mean * s).astype(jnp.float32)


def make_resnet152_params(key, num_classes=10):
    pg = _ParamGen(key)
    params = {"conv1": make_conv_bn(pg, 7, 7, 3, 64)}
    layers_cfg = [(3, 64, 1), (8, 128, 2), (36, 256, 2), (3, 512, 2)]
    cin = 64
    layers = []
    for n_blocks, width, stride in layers_cfg:
        c4 = width * 4
        # first (downsample) bottleneck
        w1, b1 = make_conv_bn(pg, 1, 1, cin, width)
        w2, b2 = make_conv_bn(pg, 3, 3, width, width)
        w3, b3 = make_conv_bn(pg, 1, 1, width, c4, scale=0.2)
        wd, bd = make_conv_bn(pg, 1, 1, cin, c4)
        block0 = {
            "w1": w1.reshape(cin, width), "b1": b1.reshape(1, width),
            "w2": w2.reshape(9, width, width), "b2": b2.reshape(1, width),
            "w3": w3.reshape(width, c4), "b3": b3.reshape(1, c4),
            "wd": wd.reshape(cin, c4), "bd": bd.reshape(1, c4),
        }
        # remaining identity bottlenecks, stacked along a leading block axis
        stk = {k: [] for k in ("w1", "b1", "w2", "b2", "w3", "b3")}
        for _ in range(n_blocks - 1):
            w1, b1 = make_conv_bn(pg, 1, 1, c4, width)
            w2, b2 = make_conv_bn(pg, 3, 3, width, width)
            w3, b3 = make_conv_bn(pg, 1, 1, width, c4, scale=0.2)
            stk["w1"].append(w1.reshape(c4, width))
            stk["b1"].append(b1.reshape(1, width))
            stk["w2"].append(w2.reshape(9, width, width))
            stk["b2"].append(b2.reshape(1, width))
            stk["w3"].append(w3.reshape(width, c4))
            stk["b3"].append(b3.reshape(1, c4))
        chain = None
        if n_blocks > 1:
            chain = {k: jnp.stack(v, axis=0) for k, v in stk.items()}
        layers.append({"stride": stride, "block0": block0, "chain": chain})
        cin = c4
    params["layers"] = layers

    bound = 1.0 / jnp.sqrt(2048.0)
    w_fc = jax.random.uniform(pg.next(), (2048, num_classes), jnp.float32,
                              -bound, bound)
    b_fc = jax.random.uniform(pg.next(), (num_classes,), jnp.float32,
                              -bound, bound)
    n_pad = _round_up(num_classes, 128)               # lane-dense FC output
    params["fc"] = (
        jnp.pad(w_fc, ((0, 0), (0, n_pad - num_classes))).astype(jnp.bfloat16),
        jnp.pad(b_fc, (0, n_pad - num_classes)).reshape(1, n_pad),
        num_classes)
    return params


# ----------------------------------------------------------------------------
# Forward pass (mirrors ResNET152Combine.forward)
# ----------------------------------------------------------------------------
def resnet152_combine_forward(x_nchw, params):
    # layout: NCHW (PyTorch) -> NHWC for all Pallas kernels.
    x = jnp.transpose(x_nchw.astype(jnp.float32), (0, 2, 3, 1))
    # feature_extract_layer01..04: conv1(7x7,s2,p3) + bn1 + relu + maxpool
    x = stem_conv(x, *params["conv1"])
    x = maxpool_3x3_s2(x)
    # feature_extract_layer05..08: layer1..layer4 (3, 8, 36, 3 bottlenecks)
    for layer in params["layers"]:
        x = fused_downsample_block(x, layer["block0"], layer["stride"])
        if layer["chain"] is not None:
            x = bottleneck_chain(x, layer["chain"])
    # post_network: avgpool + flatten + Linear(2048 -> num_classes)
    w_fc, b_fc, num_classes = params["fc"]
    return avgpool_flatten_linear(x, w_fc, b_fc, num_classes)


# ----------------------------------------------------------------------------
if __name__ == "__main__":
    key = jax.random.PRNGKey(0)
    k_x, k_p = jax.random.split(key)
    # Small input: batch=2, channels=3 (required by conv1), spatial=32x32.
    x = jax.random.normal(k_x, (2, 3, 32, 32), jnp.float32)
    params = make_resnet152_params(k_p, num_classes=10)

    out = resnet152_combine_forward(x, params)
    out = jax.block_until_ready(out)

    assert out.shape == (2, 10), out.shape
    assert bool(jnp.all(jnp.isfinite(out))), "non-finite output"
    print("KERNEL_OK")
</pallas_src>

<mosaic_0001>
module attributes {stable_mosaic.version = 11 : i64} {
  func.func @_mm_bias_kernel(%arg0: i32, %arg1: i32, %arg2: memref<256x160xbf16, #tpu.memory_space<vmem>>, %arg3: memref<160x128xbf16, #tpu.memory_space<vmem>>, %arg4: memref<1x128xf32, #tpu.memory_space<vmem>>, %arg5: memref<256x128xbf16, #tpu.memory_space<vmem>>) attributes {dimension_semantics = [#tpu.dimension_semantics<parallel>, #tpu.dimension_semantics<parallel>], iteration_bounds = array<i64: 2, 1>, scalar_prefetch = 0 : i64, scratch_operands = 0 : i64, tpu.core_type = #tpu.core_type<tc>, window_params = [{transform_indices = @transform_0, window_bounds = array<i64: 256, 160>}, {transform_indices = @transform_1, window_bounds = array<i64: 160, 128>}, {transform_indices = @transform_2, window_bounds = array<i64: 1, 128>}, {transform_indices = @transform_3, window_bounds = array<i64: 256, 128>}]} {
    %c0 = arith.constant 0 : index
    %c0_0 = arith.constant 0 : index
    %0 = vector.load %arg2[%c0, %c0_0] : memref<256x160xbf16, #tpu.memory_space<vmem>>, vector<256x160xbf16>
    %c0_1 = arith.constant 0 : index
    %c0_2 = arith.constant 0 : index
    %1 = vector.load %arg3[%c0_1, %c0_2] : memref<160x128xbf16, #tpu.memory_space<vmem>>, vector<160x128xbf16>
    %cst = arith.constant dense<0.000000e+00> : vector<256x128xf32>
    %2 = tpu.matmul %0, %1, %cst {dimension_numbers = #tpu.dot_dimension_numbers<[1], [0], [0], [1], [0, 0, 1, 1], [], []>} : vector<256x160xbf16>, vector<160x128xbf16>, vector<256x128xf32> -> vector<256x128xf32>
    %c0_3 = arith.constant 0 : index
    %c0_4 = arith.constant 0 : index
    %3 = vector.load %arg4[%c0_3, %c0_4] : memref<1x128xf32, #tpu.memory_space<vmem>>, vector<1x128xf32>
    %4 = vector.broadcast %3 : vector<1x128xf32> to vector<256x128xf32>
    %5 = arith.addf %2, %4 : vector<256x128xf32>
    %cst_5 = arith.constant 0.000000e+00 : f32
    %6 = vector.broadcast %cst_5 : f32 to vector<256x128xf32>
    %7 = arith.maximumf %5, %6 : vector<256x128xf32>
    %8 = arith.truncf %7 : vector<256x128xf32> to vector<256x128xbf16>
    %c0_6 = arith.constant 0 : index
    %c0_7 = arith.constant 0 : index
    %9 = vector.load %arg5[%c0_6, %c0_7] : memref<256x128xbf16, #tpu.memory_space<vmem>>, vector<256x128xbf16>
    tpu.vector_store %arg5[%c0_6, %c0_7], %8 {strides = array<i32>} : memref<256x128xbf16, #tpu.memory_space<vmem>>, vector<256x128xbf16>,
    return
  }
  func.func @transform_0(%arg0: i32, %arg1: i32) -> (i32, i32) {
    %c0_i32 = arith.constant 0 : i32
    %c0_i32_0 = arith.constant 0 : i32
    return %arg0, %c0_i32 : i32, i32
  }
  func.func @transform_1(%arg0: i32, %arg1: i32) -> (i32, i32) {
    %c0_i32 = arith.constant 0 : i32
    %c0_i32_0 = arith.constant 0 : i32
    return %c0_i32, %arg1 : i32, i32
  }
  func.func @transform_2(%arg0: i32, %arg1: i32) -> (i32, i32) {
    %c0_i32 = arith.constant 0 : i32
    %c0_i32_0 = arith.constant 0 : i32
    return %c0_i32, %arg1 : i32, i32
  }
  func.func @transform_3(%arg0: i32, %arg1: i32) -> (i32, i32) {
    %c0_i32 = arith.constant 0 : i32
    return %arg0, %arg1 : i32, i32
  }
}

</mosaic_0001>

<llo_original>
// kernel: tpu_custom_call.1
$region0: #{tpu_custom_call.1}
  #allocation0 [shape = 'u32[]', space=smem, size = 0x4, offset = 0x4, fixed_abs, tag = 'smem constant byte address 0x4 - core index']
  #allocation1 [shape = 'u32[72,128]{1,0:T(1,128)}', space=vmem, size = 0x9000, scoped, tag = 'internal scratch']
  %s0 = inlined_call_operand.vmem [shape: bf16[512,160], index: 0, kind: input, shape index: {}]
  %s1 = inlined_call_operand.vmem [shape: bf16[160,128], index: 1, kind: input, shape index: {}]
  %s2 = inlined_call_operand.vmem [shape: f32[1,128], index: 2, kind: input, shape index: {}]
  %s3 = inlined_call_operand.hbm [shape: bf16[512,128], index: 3, kind: output, shape index: {}]
  %s4 = sld [smem:[#allocation0]]
  $region45: #{tpu_custom_call.1} parent=0
    _
  %s6 = ssub.s32 1, %s4
  %s7 = scalar_select 0, %s6, %s4
  $region1: #{tpu_custom_call.1} parent=0
    #allocation2 [shape = 'u8[131072]{0}', space=vmem, size = 0x20000, scoped, tag = 'output window, operand 0']
    #allocation3 [shape = 's32[2]{0}', space=sflag, size = 0x8, scoped, tag = 'scoped memory for tpu_custom_call.1']
    %8 = vsyncpa [#allocation3], 0
    %s9 = scalar_lea.sflag [#allocation3], 1
    %10 = vsyncpa %s9, 0
    loop: start=0, step=1, limit=4
    $region2: #{tpu_custom_call.1} parent=1 // loop_pre_header
      _
    $region3: #{tpu_custom_call.1} parent=1 // loop_header
      %s12 = sphi 0, %s16
      %p13 = scmp.ge.s32.totalorder %s12, 4
      %s19 = sphi 0, %s31
      %s20 = sphi 0, %s27
      %s21 = sphi 0, %s19
      %s22 = sphi 0, %s20
      %s23 = sphi 0, %s21
      %s24 = sphi 0, %s22
      %s34 = sphi 0, %s36
      %s37 = sphi 0, %s34
      %s38 = sphi 0, %s37
      %s54 = sphi 0, %s38
      %s60 = sphi 0, %s62
      %s63 = sphi 0, %s60
      %s64 = sphi 0, %s63
      %s80 = sphi 0, %s64
      %s86 = sphi 0, %s88
      %s89 = sphi 0, %s86
      %s90 = sphi 0, %s89
      %s106 = sphi 0, %s90
      %s114 = sphi 0, %s116
      %s117 = sphi 0, %s114
      %s118 = sphi 0, %s117
      %s134 = sphi 0, %s118
    $region4: #{tpu_custom_call.1} parent=1 // loop_header_branch
      %15 = sbr.rel (%p13) target = $region8
    $region5: #{tpu_custom_call.1} parent=1 // loop_body
      %s17 = ssub.s32 %s12, 1
      %s18 = ssub.s32 %s12, 2
      %s25 = sadd.s32 1, %s20
      %p26 = scmp.ge.s32.totalorder %s25, 1
      %s27 = scalar_select %p26, 0, %s25
      %s28 = sadd.s32 1, %s19
      %s29 = scalar_select %p26, %s28, %s19
      %p30 = scmp.ge.s32.totalorder %s29, 2
      %s31 = scalar_select %p30, 0, %s29
      %s32 = ssub.s32 %s19, %s31
      %p33 = scmp.eq.s32.totalorder %s32, 0
      %s35 = sadd.s32 %s34, 1
      %s36 = scalar_select %p33, %s34, %s35
      %p39 = pneg %p33
      %p40 = scmp.eq.s32.totalorder %s12, 1
      %p41 = por %p39, %p40
      %p42 = scmp.ne.s32.totalorder %s34, %s37
      %p43 = scmp.eq.s32.totalorder %s12, 0
      %p44 = por %p42, %p43
      %p45 = scmp.ne.s32.totalorder %s34, %s37
      %p46 = scmp.eq.s32.totalorder %s17, 1
      %p47 = por %p45, %p46
      %p48 = scmp.ne.s32.totalorder %s37, %s38
      %p49 = scmp.eq.s32.totalorder %s17, 0
      %p50 = por %p48, %p49
      %p51 = scmp.ne.s32.totalorder %s37, %s38
      %p52 = scmp.eq.s32.totalorder %s18, 1
      %p53 = por %p51, %p52
      %p55 = scmp.ne.s32.totalorder %s38, %s54
      %p56 = scmp.eq.s32.totalorder %s18, 0
      %p57 = por %p55, %p56
      %s58 = ssub.s32 %s20, %s27
      %p59 = scmp.eq.s32.totalorder %s58, 0
      %s61 = sadd.s32 %s60, 1
      %s62 = scalar_select %p59, %s60, %s61
      %p65 = pneg %p59
      %p66 = scmp.eq.s32.totalorder %s12, 1
      %p67 = por %p65, %p66
      %p68 = scmp.ne.s32.totalorder %s60, %s63
      %p69 = scmp.eq.s32.totalorder %s12, 0
      %p70 = por %p68, %p69
      %p71 = scmp.ne.s32.totalorder %s60, %s63
      %p72 = scmp.eq.s32.totalorder %s17, 1
      %p73 = por %p71, %p72
      %p74 = scmp.ne.s32.totalorder %s63, %s64
      %p75 = scmp.eq.s32.totalorder %s17, 0
      %p76 = por %p74, %p75
      %p77 = scmp.ne.s32.totalorder %s63, %s64
      %p78 = scmp.eq.s32.totalorder %s18, 1
      %p79 = por %p77, %p78
      %p81 = scmp.ne.s32.totalorder %s64, %s80
      %p82 = scmp.eq.s32.totalorder %s18, 0
      %p83 = por %p81, %p82
      %s84 = ssub.s32 %s20, %s27
      %p85 = scmp.eq.s32.totalorder %s84, 0
      %s87 = sadd.s32 %s86, 1
      %s88 = scalar_select %p85, %s86, %s87
      %p91 = pneg %p85
      %p92 = scmp.eq.s32.totalorder %s12, 1
      %p93 = por %p91, %p92
      %p94 = scmp.ne.s32.totalorder %s86, %s89
      %p95 = scmp.eq.s32.totalorder %s12, 0
      %p96 = por %p94, %p95
      %p97 = scmp.ne.s32.totalorder %s86, %s89
      %p98 = scmp.eq.s32.totalorder %s17, 1
      %p99 = por %p97, %p98
      %p100 = scmp.ne.s32.totalorder %s89, %s90
      %p101 = scmp.eq.s32.totalorder %s17, 0
      %p102 = por %p100, %p101
      %p103 = scmp.ne.s32.totalorder %s89, %s90
      %p104 = scmp.eq.s32.totalorder %s18, 1
      %p105 = por %p103, %p104
      %p107 = scmp.ne.s32.totalorder %s90, %s106
      %p108 = scmp.eq.s32.totalorder %s18, 0
      %p109 = por %p107, %p108
      %s110 = ssub.s32 %s19, %s31
      %s111 = ssub.s32 %s20, %s27
      %s112 = sor.u32 %s110, %s111
      %p113 = scmp.eq.s32.totalorder %s112, 0
      %s115 = sadd.s32 %s114, 1
      %s116 = scalar_select %p113, %s114, %s115
      %p119 = pneg %p113
      %p120 = scmp.eq.s32.totalorder %s12, 1
      %p121 = por %p119, %p120
      %p122 = scmp.ne.s32.totalorder %s114, %s117
      %p123 = scmp.eq.s32.totalorder %s12, 0
      %p124 = por %p122, %p123
      %p125 = scmp.ne.s32.totalorder %s114, %s117
      %p126 = scmp.eq.s32.totalorder %s17, 1
      %p127 = por %p125, %p126
      %p128 = scmp.ne.s32.totalorder %s117, %s118
      %p129 = scmp.eq.s32.totalorder %s17, 0
      %p130 = por %p128, %p129
      %p131 = scmp.ne.s32.totalorder %s117, %s118
      %p132 = scmp.eq.s32.totalorder %s18, 1
      %p133 = por %p131, %p132
      %p135 = scmp.ne.s32.totalorder %s118, %s134
      %p136 = scmp.eq.s32.totalorder %s18, 0
      %p137 = por %p135, %p136
      %p138 = scmp.le.s32.totalorder 1, %s12
      %p139 = scmp.lt.s32.totalorder %s12, 3
      %p140 = pnand %p138, %p139
      %p141 = pneg %p140
      // Predicated region
      $region9: #{tpu_custom_call.1} parent=5 // pred_check
        _
      $region10: #{tpu_custom_call.1} parent=5 // pred_check_branch
        %143 = sbr.rel (%p140) target = $region12
      $region11: #{tpu_custom_call.1} parent=5 // pred_region
        %s144 = ssub.s32 %s12, 1
        // Predicated region
        $region13: #{tpu_custom_call.1} parent=11 // pred_check
          %p145 = pneg %p76
        $region14: #{tpu_custom_call.1} parent=11 // pred_check_branch
          %147 = sbr.rel (%p145) target = $region16
        $region15: #{tpu_custom_call.1} parent=11 // pred_region
          %p148 = scmp.lt.s32.totalorder %s22, 0
          %s149 = scalar_select %p148, %s22, 0
          %s150 = smul.addr %s149, 4
          %s151 = scalar_lea.vmem %s1, %s150
        $region16: #{tpu_custom_call.1} parent=11 // pred_fallthru
          _
        // Predicated region
        $region17: #{tpu_custom_call.1} parent=11 // pred_check
          %p152 = pneg %p102
        $region18: #{tpu_custom_call.1} parent=11 // pred_check_branch
          %154 = sbr.rel (%p152) target = $region20
        $region19: #{tpu_custom_call.1} parent=11 // pred_region
          %p155 = scmp.lt.s32.totalorder %s22, 0
          %s156 = scalar_select %p155, %s22, 0
          %s157 = scalar_lea.vmem %s2, %s156
        $region20: #{tpu_custom_call.1} parent=11 // pred_fallthru
          _
      $region12: #{tpu_custom_call.1} parent=5 // pred_fallthru
        _
      %p158 = scmp.lt.s32.totalorder %s12, 2
      // Predicated region
      $region21: #{tpu_custom_call.1} parent=5 // pred_check
        %p159 = pneg %p158
      $region22: #{tpu_custom_call.1} parent=5 // pred_check_branch
        %161 = sbr.rel (%p159) target = $region24
      $region23: #{tpu_custom_call.1} parent=5 // pred_region
        // Predicated region
        $region25: #{tpu_custom_call.1} parent=23 // pred_check
          %p162 = pneg %p44
        $region26: #{tpu_custom_call.1} parent=23 // pred_check_branch
          %164 = sbr.rel (%p162) target = $region28
        $region27: #{tpu_custom_call.1} parent=23 // pred_region
          %s165 = smul.u32 32, %s19
          %p166 = scmp.lt.s32.totalorder %s165, 63
          %s167 = scalar_select %p166, %s165, 63
          %s168 = smul.addr %s167, 2
          %s169 = smul.addr %s168, 4
          %s170 = scalar_lea.vmem %s0, %s169
          %s171 = smul.u32 32, %s19
        $region28: #{tpu_custom_call.1} parent=23 // pred_fallthru
          _
      $region24: #{tpu_custom_call.1} parent=5 // pred_fallthru
        _
      %p172 = scmp.le.s32.totalorder 1, %s12
      %p173 = scmp.lt.s32.totalorder %s12, 3
      %p174 = pnand %p172, %p173
      %p175 = pneg %p174
      // Predicated region
      $region29: #{tpu_custom_call.1} parent=5 // pred_check
        _
      $region30: #{tpu_custom_call.1} parent=5 // pred_check_branch
        %177 = sbr.rel (%p174) target = $region32
      $region31: #{tpu_custom_call.1} parent=5 // pred_region
        %s178 = ssub.s32 %s12, 1
        %s179 = smul.u32 32, %s21
        %p180 = scmp.lt.s32.totalorder %s179, 63
        %s181 = scalar_select %p180, %s179, 63
        %s182 = smul.addr %s181, 2
        %s183 = smul.addr %s182, 4
        %s184 = scalar_lea.vmem %s0, %s183
        %p185 = pneg %p50
        %p186 = pneg %p47
        %p187 = scmp.lt.s32.totalorder %s22, 0
        %s188 = scalar_select %p187, %s22, 0
        %s189 = smul.addr %s188, 4
        %s190 = scalar_lea.vmem %s1, %s189
        %p191 = pneg %p76
        %p192 = pneg %p73
        %p193 = scmp.lt.s32.totalorder %s22, 0
        %s194 = scalar_select %p193, %s22, 0
        %s195 = scalar_lea.vmem %s2, %s194
        %p196 = pneg %p102
        %p197 = pneg %p99
        %p198 = pneg %p130
        %p199 = pneg %p127
        %s200 = sand.u32 %s117, 1
        %s201 = scalar_lea.sflag [#allocation3], %s200
        %s202 = sand.u32 %s117, 1
        %s203 = smul.addr %s202, 128
        %s204 = scalar_lea.vmem [#allocation2], %s203
        %s205 = smul.u32 32, %s21
        %p206 = scmp.lt.s32.totalorder %s205, 63
        %s207 = scalar_select %p206, %s205, 63
        %s208 = smul.addr %s207, 2
        %s209 = smul.addr %s208, 4
        %s210 = scalar_lea.vmem %s0, %s209
        %s211 = smul.u32 32, %s21
        %p212 = scmp.lt.s32.totalorder %s22, 0
        %s213 = scalar_select %p212, %s22, 0
        %s214 = smul.addr %s213, 4
        %s215 = scalar_lea.vmem %s1, %s214
        %p216 = scmp.lt.s32.totalorder %s22, 0
        %s217 = scalar_select %p216, %s22, 0
        %s218 = scalar_lea.vmem %s2, %s217
        %s219 = smul.u32 32, %s21
        %v221 = vld [vmem:[%s210] sm:$0xff]
        %v222 = vld [vmem:[%s210 + $0x8] sm:$0xff]
        %v223 = vld [vmem:[%s210 + $0x10] sm:$0xff]
        %v224 = vld [vmem:[%s210 + $0x18] sm:$0xff]
        %v225 = vld [vmem:[%s210 + $0x20] sm:$0xff]
        %v226 = vld [vmem:[%s210 + $0x28] sm:$0xff]
        %v227 = vld [vmem:[%s210 + $0x30] sm:$0xff]
        %v228 = vld [vmem:[%s210 + $0x38] sm:$0xff]
        %v229 = vld [vmem:[%s210 + $0x40] sm:$0xff]
        %v230 = vld [vmem:[%s210 + $0x48] sm:$0xff]
        %v231 = vld [vmem:[%s210 + $0x50] sm:$0xff]
        %v232 = vld [vmem:[%s210 + $0x58] sm:$0xff]
        %v233 = vld [vmem:[%s210 + $0x60] sm:$0xff]
        %v234 = vld [vmem:[%s210 + $0x68] sm:$0xff]
        %v235 = vld [vmem:[%s210 + $0x70] sm:$0xff]
        %v236 = vld [vmem:[%s210 + $0x78] sm:$0xff]
        %v237 = vld [vmem:[%s210 + $0x80] sm:$0xff]
        %v238 = vld [vmem:[%s210 + $0x88] sm:$0xff]
        %v239 = vld [vmem:[%s210 + $0x90] sm:$0xff]
        %v240 = vld [vmem:[%s210 + $0x98] sm:$0xff]
        %v241 = vld [vmem:[%s210 + $0xa0] sm:$0xff]
        %v242 = vld [vmem:[%s210 + $0xa8] sm:$0xff]
        %v243 = vld [vmem:[%s210 + $0xb0] sm:$0xff]
        %v244 = vld [vmem:[%s210 + $0xb8] sm:$0xff]
        %v245 = vld [vmem:[%s210 + $0xc0] sm:$0xff]
        %v246 = vld [vmem:[%s210 + $0xc8] sm:$0xff]
        %v247 = vld [vmem:[%s210 + $0xd0] sm:$0xff]
        %v248 = vld [vmem:[%s210 + $0xd8] sm:$0xff]
        %v249 = vld [vmem:[%s210 + $0xe0] sm:$0xff]
        %v250 = vld [vmem:[%s210 + $0xe8] sm:$0xff]
        %v251 = vld [vmem:[%s210 + $0xf0] sm:$0xff]
        %v252 = vld [vmem:[%s210 + $0xf8] sm:$0xff]
        %v253 = vld [vmem:[%s215] sm:$0xf]
        %v254 = vld [vmem:[%s215 + $0x4] sm:$0xf]
        %v255 = vld [vmem:[%s215 + $0x8] sm:$0xf]
        %v256 = vld [vmem:[%s215 + $0xc] sm:$0xf]
        %v257 = vld [vmem:[%s215 + $0x10] sm:$0xf]
        %v258 = vld [vmem:[%s215 + $0x14] sm:$0xf]
        %v259 = vld [vmem:[%s215 + $0x18] sm:$0xf]
        %v260 = vld [vmem:[%s215 + $0x1c] sm:$0xf]
        %v261 = vld [vmem:[%s215 + $0x20] sm:$0xf]
        %v262 = vld [vmem:[%s215 + $0x24] sm:$0xf]
        %v263 = vld [vmem:[%s215 + $0x28] sm:$0xf]
        %v264 = vld [vmem:[%s215 + $0x2c] sm:$0xf]
        %v265 = vld [vmem:[%s215 + $0x30] sm:$0xf]
        %v266 = vld [vmem:[%s215 + $0x34] sm:$0xf]
        %v267 = vld [vmem:[%s215 + $0x38] sm:$0xf]
        %v268 = vld [vmem:[%s215 + $0x3c] sm:$0xf]
        %v269 = vld [vmem:[%s215 + $0x40] sm:$0xf]
        %v270 = vld [vmem:[%s215 + $0x44] sm:$0xf]
        %v271 = vld [vmem:[%s215 + $0x48] sm:$0xf]
        %v272 = vld [vmem:[%s215 + $0x4c] sm:$0xf]
        %v273 = vld [vmem:[%s218] sm:$0x1]
        %v275 = vperm.slane %v273, 0
        %v309 = vunpack.c.l.b16 %v221
        %v310 = vunpack.c.h.b16 %v221
        %v311 = vunpack.c.l.b16 %v222
        %v312 = vunpack.c.h.b16 %v222
        %v313 = vunpack.c.l.b16 %v223
        %v314 = vunpack.c.h.b16 %v223
        %v315 = vunpack.c.l.b16 %v224
        %v316 = vunpack.c.h.b16 %v224
        %v317 = vunpack.c.l.b16 %v225
        %v318 = vunpack.c.h.b16 %v225
        %v319 = vunpack.c.l.b16 %v226
        %v320 = vunpack.c.h.b16 %v226
        %v321 = vunpack.c.l.b16 %v227
        %v322 = vunpack.c.h.b16 %v227
        %v323 = vunpack.c.l.b16 %v228
        %v324 = vunpack.c.h.b16 %v228
        %v325 = vunpack.c.l.b16 %v229
        %v326 = vunpack.c.h.b16 %v229
        %v327 = vunpack.c.l.b16 %v230
        %v328 = vunpack.c.h.b16 %v230
        %v329 = vunpack.c.l.b16 %v231
        %v330 = vunpack.c.h.b16 %v231
        %v331 = vunpack.c.l.b16 %v232
        %v332 = vunpack.c.h.b16 %v232
        %v333 = vunpack.c.l.b16 %v233
        %v334 = vunpack.c.h.b16 %v233
        %v335 = vunpack.c.l.b16 %v234
        %v336 = vunpack.c.h.b16 %v234
        %v337 = vunpack.c.l.b16 %v235
        %v338 = vunpack.c.h.b16 %v235
        %v339 = vunpack.c.l.b16 %v236
        %v340 = vunpack.c.h.b16 %v236
        %v341 = vunpack.c.l.b16 %v237
        %v342 = vunpack.c.h.b16 %v237
        %v343 = vunpack.c.l.b16 %v238
        %v344 = vunpack.c.h.b16 %v238
        %v345 = vunpack.c.l.b16 %v239
        %v346 = vunpack.c.h.b16 %v239
        %v347 = vunpack.c.l.b16 %v240
        %v348 = vunpack.c.h.b16 %v240
        %v349 = vunpack.c.l.b16 %v241
        %v350 = vunpack.c.h.b16 %v241
        %v351 = vunpack.c.l.b16 %v242
        %v352 = vunpack.c.h.b16 %v242
        %v353 = vunpack.c.l.b16 %v243
        %v354 = vunpack.c.h.b16 %v243
        %v355 = vunpack.c.l.b16 %v244
        %v356 = vunpack.c.h.b16 %v244
        %v357 = vunpack.c.l.b16 %v245
        %v358 = vunpack.c.h.b16 %v245
        %v359 = vunpack.c.l.b16 %v246
        %v360 = vunpack.c.h.b16 %v246
        %v361 = vunpack.c.l.b16 %v247
        %v362 = vunpack.c.h.b16 %v247
        %v363 = vunpack.c.l.b16 %v248
        %v364 = vunpack.c.h.b16 %v248
        %v365 = vunpack.c.l.b16 %v249
        %v366 = vunpack.c.h.b16 %v249
        %v367 = vunpack.c.l.b16 %v250
        %v368 = vunpack.c.h.b16 %v250
        %v369 = vunpack.c.l.b16 %v251
        %v370 = vunpack.c.h.b16 %v251
        %v371 = vunpack.c.l.b16 %v252
        %v372 = vunpack.c.h.b16 %v252
        %v373 = vpack.c.b16 %v311, %v309
        %v374 = vpack.c.b16 %v312, %v310
        %v375 = vpack.c.b16 %v315, %v313
        %v376 = vpack.c.b16 %v316, %v314
        %v377 = vpack.c.b16 %v319, %v317
        %v378 = vpack.c.b16 %v320, %v318
        %v379 = vpack.c.b16 %v323, %v321
        %v380 = vpack.c.b16 %v324, %v322
        %v381 = vpack.c.b16 %v327, %v325
        %v382 = vpack.c.b16 %v328, %v326
        %v383 = vpack.c.b16 %v331, %v329
        %v384 = vpack.c.b16 %v332, %v330
        %v385 = vpack.c.b16 %v335, %v333
        %v386 = vpack.c.b16 %v336, %v334
        %v387 = vpack.c.b16 %v339, %v337
        %v388 = vpack.c.b16 %v340, %v338
        %v389 = vpack.c.b16 %v343, %v341
        %v390 = vpack.c.b16 %v344, %v342
        %v391 = vpack.c.b16 %v347, %v345
        %v392 = vpack.c.b16 %v348, %v346
        %v393 = vpack.c.b16 %v351, %v349
        %v394 = vpack.c.b16 %v352, %v350
        %v395 = vpack.c.b16 %v355, %v353
        %v396 = vpack.c.b16 %v356, %v354
        %v397 = vpack.c.b16 %v359, %v357
        %v398 = vpack.c.b16 %v360, %v358
        %v399 = vpack.c.b16 %v363, %v361
        %v400 = vpack.c.b16 %v364, %v362
        %v401 = vpack.c.b16 %v367, %v365
        %v402 = vpack.c.b16 %v368, %v366
        %v403 = vpack.c.b16 %v371, %v369
        %v404 = vpack.c.b16 %v372, %v370
        %v441 = vunpack.c.l.b16 %v253
        %v442 = vunpack.c.l.b16 %v254
        %v443 = vunpack.c.l.b16 %v255
        %v444 = vunpack.c.l.b16 %v256
        %v445 = vunpack.c.l.b16 %v257
        %v446 = vunpack.c.l.b16 %v258
        %v447 = vunpack.c.l.b16 %v259
        %v448 = vunpack.c.l.b16 %v260
        %v449 = vunpack.c.l.b16 %v261
        %v450 = vunpack.c.l.b16 %v262
        %v451 = vunpack.c.l.b16 %v263
        %v452 = vunpack.c.l.b16 %v264
        %v453 = vunpack.c.l.b16 %v265
        %v454 = vunpack.c.l.b16 %v266
        %v455 = vunpack.c.l.b16 %v267
        %v456 = vunpack.c.l.b16 %v268
        %v457 = vunpack.c.l.b16 %v269
        %v458 = vunpack.c.l.b16 %v270
        %v459 = vunpack.c.l.b16 %v271
        %v460 = vunpack.c.l.b16 %v272
        %v461 = vpack.c.b16 %v442, %v441
        %v462 = vpack.c.b16 %v444, %v443
        %v463 = vpack.c.b16 %v446, %v445
        %v464 = vpack.c.b16 %v448, %v447
        %v465 = vpack.c.b16 %v450, %v449
        %v466 = vpack.c.b16 %v452, %v451
        %v467 = vpack.c.b16 %v454, %v453
        %v468 = vpack.c.b16 %v456, %v455
        %v469 = vpack.c.b16 %v458, %v457
        %v470 = vpack.c.b16 %v460, %v459
        %vm481 = vcmask 261120
        %v483 = vsel %vm481, %v374, 0
        %v486 = vsel %vm481, %v376, 0
        %v489 = vsel %vm481, %v378, 0
        %v492 = vsel %vm481, %v380, 0
        %v495 = vsel %vm481, %v382, 0
        %v498 = vsel %vm481, %v384, 0
        %v501 = vsel %vm481, %v386, 0
        %v504 = vsel %vm481, %v388, 0
        %v507 = vsel %vm481, %v390, 0
        %v510 = vsel %vm481, %v392, 0
        %v513 = vsel %vm481, %v394, 0
        %v516 = vsel %vm481, %v396, 0
        %v519 = vsel %vm481, %v398, 0
        %v522 = vsel %vm481, %v400, 0
        %v525 = vsel %vm481, %v402, 0
        %v528 = vsel %vm481, %v404, 0
        %530 = vmatpush.bf16.msra.mxu0 %v468
        %531 = vmatpush.bf16.msra.mxu0 %v467
        %532 = vmatpush.bf16.msra.mxu0 %v466
        %533 = vmatpush.bf16.msra.mxu0 %v465
        %534 = vmatpush.bf16.msra.mxu0 %v464
        %535 = vmatpush.bf16.msra.mxu0 %v463
        %536 = vmatpush.bf16.msra.mxu0 %v462
        %537 = vmatpush.bf16.msra.mxu0 %v461
        %538 = vmatmul.bf16.gmra.mxu0 %v373
        %v539 = vpop.f32.mrf.mxu0
        %v540 = vadd.f32 %v275, %v539
        %v541 = vpop.f32.mrf.mxu0
        %v542 = vadd.f32 %v275, %v541
        %543 = vmatmul.bf16.gmra.mxu0 %v375
        %v544 = vpop.f32.mrf.mxu0
        %v545 = vadd.f32 %v275, %v544
        %v546 = vpop.f32.mrf.mxu0
        %v547 = vadd.f32 %v275, %v546
        %548 = vmatmul.bf16.gmra.mxu0 %v377
        %v549 = vpop.f32.mrf.mxu0
        %v550 = vadd.f32 %v275, %v549
        %v551 = vpop.f32.mrf.mxu0
        %v552 = vadd.f32 %v275, %v551
        %553 = vmatmul.bf16.gmra.mxu0 %v379
        %v554 = vpop.f32.mrf.mxu0
        %v555 = vadd.f32 %v275, %v554
        %v556 = vpop.f32.mrf.mxu0
        %v557 = vadd.f32 %v275, %v556
        %558 = vmatmul.bf16.gmra.mxu0 %v381
        %v559 = vpop.f32.mrf.mxu0
        %v560 = vadd.f32 %v275, %v559
        %v561 = vpop.f32.mrf.mxu0
        %v562 = vadd.f32 %v275, %v561
        %563 = vmatmul.bf16.gmra.mxu0 %v383
        %v564 = vpop.f32.mrf.mxu0
        %v565 = vadd.f32 %v275, %v564
        %v566 = vpop.f32.mrf.mxu0
        %v567 = vadd.f32 %v275, %v566
        %568 = vmatmul.bf16.gmra.mxu0 %v385
        %v569 = vpop.f32.mrf.mxu0
        %v570 = vadd.f32 %v275, %v569
        %v571 = vpop.f32.mrf.mxu0
        %v572 = vadd.f32 %v275, %v571
        %573 = vmatmul.bf16.gmra.mxu0 %v387
        %v574 = vpop.f32.mrf.mxu0
        %v575 = vadd.f32 %v275, %v574
        %v576 = vpop.f32.mrf.mxu0
        %v577 = vadd.f32 %v275, %v576
        %578 = vmatmul.bf16.gmra.mxu0 %v389
        %v579 = vpop.f32.mrf.mxu0
        %v580 = vadd.f32 %v275, %v579
        %v581 = vpop.f32.mrf.mxu0
        %v582 = vadd.f32 %v275, %v581
        %583 = vmatmul.bf16.gmra.mxu0 %v391
        %v584 = vpop.f32.mrf.mxu0
        %v585 = vadd.f32 %v275, %v584
        %v586 = vpop.f32.mrf.mxu0
        %v587 = vadd.f32 %v275, %v586
        %588 = vmatmul.bf16.gmra.mxu0 %v393
        %v589 = vpop.f32.mrf.mxu0
        %v590 = vadd.f32 %v275, %v589
        %v591 = vpop.f32.mrf.mxu0
        %v592 = vadd.f32 %v275, %v591
        %593 = vmatmul.bf16.gmra.mxu0 %v395
        %v594 = vpop.f32.mrf.mxu0
        %v595 = vadd.f32 %v275, %v594
        %v596 = vpop.f32.mrf.mxu0
        %v597 = vadd.f32 %v275, %v596
        %598 = vmatmul.bf16.gmra.mxu0 %v397
        %v599 = vpop.f32.mrf.mxu0
        %v600 = vadd.f32 %v275, %v599
        %v601 = vpop.f32.mrf.mxu0
        %v602 = vadd.f32 %v275, %v601
        %603 = vmatmul.bf16.gmra.mxu0 %v399
        %v604 = vpop.f32.mrf.mxu0
        %v605 = vadd.f32 %v275, %v604
        %v606 = vpop.f32.mrf.mxu0
        %v607 = vadd.f32 %v275, %v606
        %608 = vmatmul.bf16.gmra.mxu0 %v401
        %v609 = vpop.f32.mrf.mxu0
        %v610 = vadd.f32 %v275, %v609
        %v611 = vpop.f32.mrf.mxu0
        %v612 = vadd.f32 %v275, %v611
        %613 = vmatmul.bf16.gmra.mxu0 %v403
        %v614 = vpop.f32.mrf.mxu0
        %v615 = vadd.f32 %v275, %v614
        %v616 = vpop.f32.mrf.mxu0
        %v617 = vadd.f32 %v275, %v616
        %618 = vdwg.mxu0
        %619 = vmatpush.bf16.msra.mxu0 0
        %620 = vmatpush.bf16.msra.mxu0 0
        %621 = vmatpush.bf16.msra.mxu0 0
        %622 = vmatpush.bf16.msra.mxu0 0
        %623 = vmatpush.bf16.msra.mxu0 0
        %624 = vmatpush.bf16.msra.mxu0 0
        %625 = vmatpush.bf16.msra.mxu0 %v470
        %626 = vmatpush.bf16.msra.mxu0 %v469
        %627 = vmatmul.bf16.gmra.mxu0 %v483
        %v628 = vpop.f32.mrf.mxu0
        %v629 = vadd.f32 %v540, %v628
        %v630 = vpop.f32.mrf.mxu0
        %v631 = vadd.f32 %v542, %v630
        %632 = vmatmul.bf16.gmra.mxu0 %v486
        %v633 = vpop.f32.mrf.mxu0
        %v634 = vadd.f32 %v545, %v633
        %v635 = vpop.f32.mrf.mxu0
        %v636 = vadd.f32 %v547, %v635
        %637 = vmatmul.bf16.gmra.mxu0 %v489
        %v638 = vpop.f32.mrf.mxu0
        %v639 = vadd.f32 %v550, %v638
        %v640 = vpop.f32.mrf.mxu0
        %v641 = vadd.f32 %v552, %v640
        %642 = vmatmul.bf16.gmra.mxu0 %v492
        %v643 = vpop.f32.mrf.mxu0
        %v644 = vadd.f32 %v555, %v643
        %v645 = vpop.f32.mrf.mxu0
        %v646 = vadd.f32 %v557, %v645
        %647 = vmatmul.bf16.gmra.mxu0 %v495
        %v648 = vpop.f32.mrf.mxu0
        %v649 = vadd.f32 %v560, %v648
        %v650 = vpop.f32.mrf.mxu0
        %v651 = vadd.f32 %v562, %v650
        %652 = vmatmul.bf16.gmra.mxu0 %v498
        %v653 = vpop.f32.mrf.mxu0
        %v654 = vadd.f32 %v565, %v653
        %v655 = vpop.f32.mrf.mxu0
        %v656 = vadd.f32 %v567, %v655
        %657 = vmatmul.bf16.gmra.mxu0 %v501
        %v658 = vpop.f32.mrf.mxu0
        %v659 = vadd.f32 %v570, %v658
        %v660 = vpop.f32.mrf.mxu0
        %v661 = vadd.f32 %v572, %v660
        %662 = vmatmul.bf16.gmra.mxu0 %v504
        %v663 = vpop.f32.mrf.mxu0
        %v664 = vadd.f32 %v575, %v663
        %v665 = vpop.f32.mrf.mxu0
        %v666 = vadd.f32 %v577, %v665
        %667 = vmatmul.bf16.gmra.mxu0 %v507
        %v668 = vpop.f32.mrf.mxu0
        %v669 = vadd.f32 %v580, %v668
        %v670 = vpop.f32.mrf.mxu0
        %v671 = vadd.f32 %v582, %v670
        %672 = vmatmul.bf16.gmra.mxu0 %v510
        %v673 = vpop.f32.mrf.mxu0
        %v674 = vadd.f32 %v585, %v673
        %v675 = vpop.f32.mrf.mxu0
        %v676 = vadd.f32 %v587, %v675
        %677 = vmatmul.bf16.gmra.mxu0 %v513
        %v678 = vpop.f32.mrf.mxu0
        %v679 = vadd.f32 %v590, %v678
        %v680 = vpop.f32.mrf.mxu0
        %v681 = vadd.f32 %v592, %v680
        %682 = vmatmul.bf16.gmra.mxu0 %v516
        %v683 = vpop.f32.mrf.mxu0
        %v684 = vadd.f32 %v595, %v683
        %v685 = vpop.f32.mrf.mxu0
        %v686 = vadd.f32 %v597, %v685
        %687 = vmatmul.bf16.gmra.mxu0 %v519
        %v688 = vpop.f32.mrf.mxu0
        %v689 = vadd.f32 %v600, %v688
        %v690 = vpop.f32.mrf.mxu0
        %v691 = vadd.f32 %v602, %v690
        %692 = vmatmul.bf16.gmra.mxu0 %v522
        %v693 = vpop.f32.mrf.mxu0
        %v694 = vadd.f32 %v605, %v693
        %v695 = vpop.f32.mrf.mxu0
        %v696 = vadd.f32 %v607, %v695
        %697 = vmatmul.bf16.gmra.mxu0 %v525
        %v698 = vpop.f32.mrf.mxu0
        %v699 = vadd.f32 %v610, %v698
        %v700 = vpop.f32.mrf.mxu0
        %v701 = vadd.f32 %v612, %v700
        %702 = vmatmul.bf16.gmra.mxu0 %v528
        %v703 = vpop.f32.mrf.mxu0
        %v704 = vadd.f32 %v615, %v703
        %v705 = vpop.f32.mrf.mxu0
        %v706 = vadd.f32 %v617, %v705
        %707 = vdwg.mxu0
        %v708 = vmax.f32 %v629, 0.0
        %v709 = vmax.f32 %v631, 0.0
        %v710 = vmax.f32 %v634, 0.0
        %v711 = vmax.f32 %v636, 0.0
        %v712 = vmax.f32 %v639, 0.0
        %v713 = vmax.f32 %v641, 0.0
        %v714 = vmax.f32 %v644, 0.0
        %v715 = vmax.f32 %v646, 0.0
        %v716 = vmax.f32 %v649, 0.0
        %v717 = vmax.f32 %v651, 0.0
        %v718 = vmax.f32 %v654, 0.0
        %v719 = vmax.f32 %v656, 0.0
        %v720 = vmax.f32 %v659, 0.0
        %v721 = vmax.f32 %v661, 0.0
        %v722 = vmax.f32 %v664, 0.0
        %v723 = vmax.f32 %v666, 0.0
        %v724 = vmax.f32 %v669, 0.0
        %v725 = vmax.f32 %v671, 0.0
        %v726 = vmax.f32 %v674, 0.0
        %v727 = vmax.f32 %v676, 0.0
        %v728 = vmax.f32 %v679, 0.0
        %v729 = vmax.f32 %v681, 0.0
        %v730 = vmax.f32 %v684, 0.0
        %v731 = vmax.f32 %v686, 0.0
        %v732 = vmax.f32 %v689, 0.0
        %v733 = vmax.f32 %v691, 0.0
        %v734 = vmax.f32 %v694, 0.0
        %v735 = vmax.f32 %v696, 0.0
        %v736 = vmax.f32 %v699, 0.0
        %v737 = vmax.f32 %v701, 0.0
        %v738 = vmax.f32 %v704, 0.0
        %v739 = vmax.f32 %v706, 0.0
        %v740 = vpack.c.bf16 %v708, %v708
        %v741 = vpack.c.bf16 %v709, %v709
        %v742 = vpack.c.bf16 %v710, %v710
        %v743 = vpack.c.bf16 %v711, %v711
        %v744 = vpack.c.bf16 %v712, %v712
        %v745 = vpack.c.bf16 %v713, %v713
        %v746 = vpack.c.bf16 %v714, %v714
        %v747 = vpack.c.bf16 %v715, %v715
        %v748 = vpack.c.bf16 %v716, %v716
        %v749 = vpack.c.bf16 %v717, %v717
        %v750 = vpack.c.bf16 %v718, %v718
        %v751 = vpack.c.bf16 %v719, %v719
        %v752 = vpack.c.bf16 %v720, %v720
        %v753 = vpack.c.bf16 %v721, %v721
        %v754 = vpack.c.bf16 %v722, %v722
        %v755 = vpack.c.bf16 %v723, %v723
        %v756 = vpack.c.bf16 %v724, %v724
        %v757 = vpack.c.bf16 %v725, %v725
        %v758 = vpack.c.bf16 %v726, %v726
        %v759 = vpack.c.bf16 %v727, %v727
        %v760 = vpack.c.bf16 %v728, %v728
        %v761 = vpack.c.bf16 %v729, %v729
        %v762 = vpack.c.bf16 %v730, %v730
        %v763 = vpack.c.bf16 %v731, %v731
        %v764 = vpack.c.bf16 %v732, %v732
        %v765 = vpack.c.bf16 %v733, %v733
        %v766 = vpack.c.bf16 %v734, %v734
        %v767 = vpack.c.bf16 %v735, %v735
        %v768 = vpack.c.bf16 %v736, %v736
        %v769 = vpack.c.bf16 %v737, %v737
        %v770 = vpack.c.bf16 %v738, %v738
        %v771 = vpack.c.bf16 %v739, %v739
        %772 = vst [vmem:[%s204] sm:$0xf] %v740
        %773 = vst [vmem:[%s204 + $0x4] sm:$0xf] %v741
        %774 = vst [vmem:[%s204 + $0x8] sm:$0xf] %v742
        %775 = vst [vmem:[%s204 + $0xc] sm:$0xf] %v743
        %776 = vst [vmem:[%s204 + $0x10] sm:$0xf] %v744
        %777 = vst [vmem:[%s204 + $0x14] sm:$0xf] %v745
        %778 = vst [vmem:[%s204 + $0x18] sm:$0xf] %v746
        %779 = vst [vmem:[%s204 + $0x1c] sm:$0xf] %v747
        %780 = vst [vmem:[%s204 + $0x20] sm:$0xf] %v748
        %781 = vst [vmem:[%s204 + $0x24] sm:$0xf] %v749
        %782 = vst [vmem:[%s204 + $0x28] sm:$0xf] %v750
        %783 = vst [vmem:[%s204 + $0x2c] sm:$0xf] %v751
        %784 = vst [vmem:[%s204 + $0x30] sm:$0xf] %v752
        %785 = vst [vmem:[%s204 + $0x34] sm:$0xf] %v753
        %786 = vst [vmem:[%s204 + $0x38] sm:$0xf] %v754
        %787 = vst [vmem:[%s204 + $0x3c] sm:$0xf] %v755
        %788 = vst [vmem:[%s204 + $0x40] sm:$0xf] %v756
        %789 = vst [vmem:[%s204 + $0x44] sm:$0xf] %v757
        %790 = vst [vmem:[%s204 + $0x48] sm:$0xf] %v758
        %791 = vst [vmem:[%s204 + $0x4c] sm:$0xf] %v759
        %792 = vst [vmem:[%s204 + $0x50] sm:$0xf] %v760
        %793 = vst [vmem:[%s204 + $0x54] sm:$0xf] %v761
        %794 = vst [vmem:[%s204 + $0x58] sm:$0xf] %v762
        %795 = vst [vmem:[%s204 + $0x5c] sm:$0xf] %v763
        %796 = vst [vmem:[%s204 + $0x60] sm:$0xf] %v764
        %797 = vst [vmem:[%s204 + $0x64] sm:$0xf] %v765
        %798 = vst [vmem:[%s204 + $0x68] sm:$0xf] %v766
        %799 = vst [vmem:[%s204 + $0x6c] sm:$0xf] %v767
        %800 = vst [vmem:[%s204 + $0x70] sm:$0xf] %v768
        %801 = vst [vmem:[%s204 + $0x74] sm:$0xf] %v769
        %802 = vst [vmem:[%s204 + $0x78] sm:$0xf] %v770
        %803 = vst [vmem:[%s204 + $0x7c] sm:$0xf] %v771
        %s804 = sand.u32 %s117, 1
        %s805 = scalar_lea.sflag [#allocation3], %s804
        %s806 = sand.u32 %s117, 1
        %s807 = smul.addr %s806, 128
        %s808 = scalar_lea.vmem [#allocation2], %s807
        // Predicated region
        $region33: #{tpu_custom_call.1} parent=31 // pred_check
          %p809 = pneg %p127
        $region34: #{tpu_custom_call.1} parent=31 // pred_check_branch
          %811 = sbr.rel (%p809) target = $region36
        $region35: #{tpu_custom_call.1} parent=31 // pred_region
          %s812 = smul.u32 32, %s21
          %814 = vsyncadd %s805, 0
          %s815 = sadd.s32 %s22, %s812
          %s816 = smul.addr %s815, 4
          %s817 = scalar_lea.hbm %s3, %s816
          %s818 = sshll.u32 %s808, 4
          %s819 = int_to_ptr.vmem [resolvable:$true] %s818
          %s820 = sshll.u32 %s817, 4
          %s821 = int_to_ptr.hbm [resolvable:$true] %s820
          %826 = dma.vmem_to_hbm [thread:$0]  %s819, 2048, %s821, %s805, 64, 64, 4
        $region36: #{tpu_custom_call.1} parent=31 // pred_fallthru
          _
      $region32: #{tpu_custom_call.1} parent=5 // pred_fallthru
        _
      %p827 = scmp.le.s32.totalorder 2, %s12
      // Predicated region
      $region37: #{tpu_custom_call.1} parent=5 // pred_check
        %p828 = pneg %p827
      $region38: #{tpu_custom_call.1} parent=5 // pred_check_branch
        %830 = sbr.rel (%p828) target = $region40
      $region39: #{tpu_custom_call.1} parent=5 // pred_region
        %s831 = ssub.s32 %s12, 2
        // Predicated region
        $region41: #{tpu_custom_call.1} parent=39 // pred_check
          %p832 = pneg %p133
        $region42: #{tpu_custom_call.1} parent=39 // pred_check_branch
          %834 = sbr.rel (%p832) target = $region44
        $region43: #{tpu_custom_call.1} parent=39 // pred_region
          %s835 = sand.u32 %s118, 1
          %s836 = scalar_lea.sflag [#allocation3], %s835
          %s837 = sand.u32 %s118, 1
          %s838 = smul.addr %s837, 128
          %s839 = scalar_lea.vmem [#allocation2], %s838
          %841 = dma.done %s836, 2048
        $region44: #{tpu_custom_call.1} parent=39 // pred_fallthru
          _
      $region40: #{tpu_custom_call.1} parent=5 // pred_fallthru
        _
    $region6: #{tpu_custom_call.1} parent=1 // loop_footer
      %s16 = sadd.s32 1, %s12
    $region7: #{tpu_custom_call.1} parent=1 // loop_footer_branch
      %11 = sbr.rel target = $region3
    $region8: #{tpu_custom_call.1} parent=1 // loop_exit
      _
    %842 = vsyncpa [#allocation3], 1
    %s843 = scalar_lea.sflag [#allocation3], 1
    %844 = vsyncpa %s843, 1

</llo_original>
